<compile_context>
chip_gen: v7x
topology: tpu7x:2x2x1
jax: 0.10.0
libtpu: 0.0.40
codegen_flags: <defaults>
</compile_context>

<pallas_src>
import jax
import jax.numpy as jnp
from jax import lax
from jax.experimental import pallas as pl
from jax.experimental.pallas import tpu as pltpu


# ----------------------------- fused LSTM + MLP kernel -----------------------------
def lstm_fused_kernel(x_ref, wih_ref, whh_ref, b_ref, w12_ref, b12_ref, out_ref):
    T, B, D = x_ref.shape                       # x arrives time-major (T, B, D)
    H = whh_ref.shape[0]

    # --- Hoisted input projection: one MXU push covers every (t, b); bias folded once. ---
    x_flat = x_ref[...].reshape(T * B, D)                        # row k = t*B + b
    xw = (jnp.dot(x_flat, wih_ref[...], preferred_element_type=jnp.float32)
          + b_ref[...])                                          # (T*B, 4H)
    xw = xw.reshape(T, B, 4 * H)                                 # xw[t] is sublane-contiguous

    whh = whh_ref[...]                                           # (H, 4H), VMEM-resident
    h = jnp.zeros((B, H), jnp.float32)
    c = jnp.zeros((B, H), jnp.float32)

    # PyTorch reshape quirk: h(B,T,H) -> view(B*T,H) -> fc -> view(T,B,O) -> [-1]
    # keeps only flat rows k = (T-1)*B + b' (b = k // T, t = k % T).  Determine at
    # trace time which timesteps are actually consumed and keep only those states live.
    sel_rows = [(T - 1) * B + bp for bp in range(B)]
    needed_ts = {k % T for k in sel_rows}
    saved = {}

    # Statically unrolled recurrence; only h @ W_hh^T sits on the serial critical path.
    for t in range(T):
        gates = jnp.dot(h, whh, preferred_element_type=jnp.float32) + xw[t]
        sig = jax.nn.sigmoid(gates)        # one full-width (B, 4H) EUP pass
        tah = jnp.tanh(gates)              # one full-width (B, 4H) EUP pass
        i = sig[:, 0 * H:1 * H]
        f = sig[:, 1 * H:2 * H]
        g = tah[:, 2 * H:3 * H]
        o = sig[:, 3 * H:4 * H]
        c = f * c + i * g
        h = o * jnp.tanh(c)
        if t in needed_ts:                 # trace-time check; no extra live states
            saved[t] = h

    rows = [saved[k % T][(k // T):(k // T) + 1, :] for k in sel_rows]   # B x (1, H)
    h_sel = rows[0] if B == 1 else jnp.concatenate(rows, axis=0)        # (B, H)

    # Folded fc1+fc2: single MXU push + bias add in the epilogue.
    y = jnp.dot(h_sel, w12_ref[...], preferred_element_type=jnp.float32) + b12_ref[...]
    out_ref[...] = y.astype(out_ref.dtype)


# ----------------------------- wrapper -----------------------------
@jax.jit
def lstm_model_forward(x, w_ih_t, w_hh_t, b_lstm, w1_t, b1, w2_t, b2):
    # x: (B, T, D) batch_first, exactly like the PyTorch module.
    B, T, D = x.shape
    H = w_hh_t.shape[0]
    O = w2_t.shape[1]

    # One-time layout / algebra prep outside the kernel (cheap XLA ops):
    x_tbd = jnp.transpose(x, (1, 0, 2))          # (T, B, D) time-major
    w12 = jnp.dot(w1_t, w2_t)                    # (H, O)  folded fc1 @ fc2 (no activation between)
    b12 = jnp.dot(b1, w2_t) + b2                 # (1, O)  folded bias

    f32 = 4
    flops = (2 * T * B * D * 4 * H        # input projection
             + 2 * T * B * H * 4 * H      # recurrent projection
             + 2 * B * H * O)             # folded MLP tail
    transcendentals = T * B * 9 * H       # sigmoid(4H) + tanh(4H) + tanh(H) per (t, b)
    bytes_accessed = f32 * (T * B * D + D * 4 * H + H * 4 * H + 4 * H
                            + H * O + O + B * O)

    return pl.pallas_call(
        lstm_fused_kernel,
        out_shape=jax.ShapeDtypeStruct((B, O), x.dtype),
        in_specs=[pl.BlockSpec(memory_space=pltpu.MemorySpace.VMEM)] * 6,
        out_specs=pl.BlockSpec(memory_space=pltpu.MemorySpace.VMEM),
        cost_estimate=pl.CostEstimate(flops=flops,
                                      transcendentals=transcendentals,
                                      bytes_accessed=bytes_accessed),
    )(x_tbd, w_ih_t, w_hh_t, b_lstm, w12, b12)


# ----------------------------- pure-JAX reference (unfolded, full quirk) -----------------------------
def reference_forward(x, w_ih_t, w_hh_t, b_lstm, w1_t, b1, w2_t, b2):
    B, T, D = x.shape
    H = w_hh_t.shape[0]

    def step(carry, x_t):
        h, c = carry
        gates = x_t @ w_ih_t + h @ w_hh_t + b_lstm
        i = jax.nn.sigmoid(gates[:, 0 * H:1 * H])
        f = jax.nn.sigmoid(gates[:, 1 * H:2 * H])
        g = jnp.tanh(gates[:, 2 * H:3 * H])
        o = jax.nn.sigmoid(gates[:, 3 * H:4 * H])
        c_new = f * c + i * g
        h_new = o * jnp.tanh(c_new)
        return (h_new, c_new), h_new

    h0 = jnp.zeros((B, H), jnp.float32)
    c0 = jnp.zeros((B, H), jnp.float32)
    (_, _), hs = lax.scan(step, (h0, c0), jnp.transpose(x, (1, 0, 2)))
    h_bth = jnp.transpose(hs, (1, 0, 2))          # (B, T, H)
    h_flat = h_bth.reshape(-1, H)                 # (B*T, H)
    out = (h_flat @ w1_t + b1) @ w2_t + b2        # (B*T, O), fc1 then fc2 (no activation)
    return out.reshape(T, B, -1)[-1]              # (B, O)


if __name__ == "__main__":
    # cfg: model__input_dim=16, model__hidden_dim=32, model__output_dim=8
    B, T, D, H, O = 2, 8, 16, 32, 8

    key = jax.random.PRNGKey(0)
    ks = jax.random.split(key, 9)
    s = 1.0 / jnp.sqrt(H)

    x = jax.random.normal(ks[0], (B, T, D), jnp.float32)

    # PyTorch-layout parameters (W_ih (4H,D), W_hh (4H,H), fc weights (out,in)).
    w_ih = jax.random.uniform(ks[1], (4 * H, D), jnp.float32, -s, s)
    w_hh = jax.random.uniform(ks[2], (4 * H, H), jnp.float32, -s, s)
    b_ih = jax.random.uniform(ks[3], (4 * H,), jnp.float32, -s, s)
    b_hh = jax.random.uniform(ks[4], (4 * H,), jnp.float32, -s, s)
    fc1_w = jax.random.uniform(ks[5], (H, H), jnp.float32, -s, s)
    fc1_b = jax.random.uniform(ks[6], (H,), jnp.float32, -s, s)
    fc2_w = jax.random.uniform(ks[7], (O, H), jnp.float32, -s, s)
    fc2_b = jax.random.uniform(ks[8], (O,), jnp.float32, -s, s)

    # One-time layout prep: transposed weights, fused LSTM bias.
    w_ih_t = w_ih.T                      # (D, 4H)
    w_hh_t = w_hh.T                      # (H, 4H)
    b_lstm = (b_ih + b_hh)[None, :]      # (1, 4H)
    w1_t = fc1_w.T                       # (H, H)
    b1 = fc1_b[None, :]                  # (1, H)
    w2_t = fc2_w.T                       # (H, O)
    b2 = fc2_b[None, :]                  # (1, O)

    y = lstm_model_forward(x, w_ih_t, w_hh_t, b_lstm, w1_t, b1, w2_t, b2)
    y = jax.block_until_ready(y)

    y_ref = reference_forward(x, w_ih_t, w_hh_t, b_lstm, w1_t, b1, w2_t, b2)
    assert y.shape == (B, O), y.shape
    assert jnp.allclose(y, y_ref, atol=1e-5, rtol=1e-5), (
        float(jnp.max(jnp.abs(y - y_ref))))

    print("KERNEL_OK")
</pallas_src>

<mosaic_0001>
module attributes {stable_mosaic.version = 11 : i64} {
  func.func @lstm_fused_kernel(%arg0: memref<8x2x16xf32, #tpu.memory_space<vmem>>, %arg1: memref<16x128xf32, #tpu.memory_space<vmem>>, %arg2: memref<32x128xf32, #tpu.memory_space<vmem>>, %arg3: memref<1x128xf32, #tpu.memory_space<vmem>>, %arg4: memref<32x8xf32, #tpu.memory_space<vmem>>, %arg5: memref<1x8xf32, #tpu.memory_space<vmem>>, %arg6: memref<2x8xf32, #tpu.memory_space<vmem>>) attributes {dimension_semantics = [], scalar_prefetch = 0 : i64, scratch_operands = 0 : i64, tpu.core_type = #tpu.core_type<tc>} {
    %c0 = arith.constant 0 : index
    %c0_0 = arith.constant 0 : index
    %c0_1 = arith.constant 0 : index
    %0 = vector.load %arg0[%c0, %c0_0, %c0_1] : memref<8x2x16xf32, #tpu.memory_space<vmem>>, vector<8x2x16xf32>
    %1 = vector.shape_cast %0 : vector<8x2x16xf32> to vector<16x16xf32>
    %c0_2 = arith.constant 0 : index
    %c0_3 = arith.constant 0 : index
    %2 = vector.load %arg1[%c0_2, %c0_3] : memref<16x128xf32, #tpu.memory_space<vmem>>, vector<16x128xf32>
    %cst = arith.constant dense<0.000000e+00> : vector<16x128xf32>
    %3 = tpu.matmul %1, %2, %cst {dimension_numbers = #tpu.dot_dimension_numbers<[1], [0], [0], [1], [0, 0, 1, 1], [], []>} : vector<16x16xf32>, vector<16x128xf32>, vector<16x128xf32> -> vector<16x128xf32>
    %c0_4 = arith.constant 0 : index
    %c0_5 = arith.constant 0 : index
    %4 = vector.load %arg3[%c0_4, %c0_5] : memref<1x128xf32, #tpu.memory_space<vmem>>, vector<1x128xf32>
    %5 = vector.broadcast %4 : vector<1x128xf32> to vector<16x128xf32>
    %6 = arith.addf %3, %5 : vector<16x128xf32>
    %7 = vector.shape_cast %6 : vector<16x128xf32> to vector<8x2x128xf32>
    %c0_6 = arith.constant 0 : index
    %c0_7 = arith.constant 0 : index
    %8 = vector.load %arg2[%c0_6, %c0_7] : memref<32x128xf32, #tpu.memory_space<vmem>>, vector<32x128xf32>
    %cst_8 = arith.constant 0.000000e+00 : f32
    %9 = vector.broadcast %cst_8 : f32 to vector<2x32xf32>
    %cst_9 = arith.constant 0.000000e+00 : f32
    %10 = vector.broadcast %cst_9 : f32 to vector<2x32xf32>
    %cst_10 = arith.constant dense<0.000000e+00> : vector<2x128xf32>
    %11 = tpu.matmul %9, %8, %cst_10 {dimension_numbers = #tpu.dot_dimension_numbers<[1], [0], [0], [1], [0, 0, 1, 1], [], []>} : vector<2x32xf32>, vector<32x128xf32>, vector<2x128xf32> -> vector<2x128xf32>
    %12 = vector.extract_strided_slice %7 {offsets = [0, 0, 0], sizes = [1, 2, 128], strides = [1, 1, 1]} : vector<8x2x128xf32> to vector<1x2x128xf32>
    %13 = vector.shape_cast %12 : vector<1x2x128xf32> to vector<2x128xf32>
    %14 = arith.addf %11, %13 : vector<2x128xf32>
    %15 = arith.negf %14 : vector<2x128xf32>
    %16 = math.exp %15 : vector<2x128xf32>
    %cst_11 = arith.constant 1.000000e+00 : f32
    %17 = vector.broadcast %cst_11 : f32 to vector<2x128xf32>
    %18 = arith.addf %17, %16 : vector<2x128xf32>
    %19 = arith.divf %17, %18 : vector<2x128xf32>
    %20 = math.tanh %14 : vector<2x128xf32>
    %21 = vector.extract_strided_slice %19 {offsets = [0, 0], sizes = [2, 32], strides = [1, 1]} : vector<2x128xf32> to vector<2x32xf32>
    %22 = vector.extract_strided_slice %19 {offsets = [0, 32], sizes = [2, 32], strides = [1, 1]} : vector<2x128xf32> to vector<2x32xf32>
    %23 = vector.extract_strided_slice %20 {offsets = [0, 64], sizes = [2, 32], strides = [1, 1]} : vector<2x128xf32> to vector<2x32xf32>
    %24 = vector.extract_strided_slice %19 {offsets = [0, 96], sizes = [2, 32], strides = [1, 1]} : vector<2x128xf32> to vector<2x32xf32>
    %25 = arith.mulf %22, %10 : vector<2x32xf32>
    %26 = arith.mulf %21, %23 : vector<2x32xf32>
    %27 = arith.addf %25, %26 : vector<2x32xf32>
    %28 = math.tanh %27 : vector<2x32xf32>
    %29 = arith.mulf %24, %28 : vector<2x32xf32>
    %cst_12 = arith.constant dense<0.000000e+00> : vector<2x128xf32>
    %30 = tpu.matmul %29, %8, %cst_12 {dimension_numbers = #tpu.dot_dimension_numbers<[1], [0], [0], [1], [0, 0, 1, 1], [], []>} : vector<2x32xf32>, vector<32x128xf32>, vector<2x128xf32> -> vector<2x128xf32>
    %31 = vector.extract_strided_slice %7 {offsets = [1, 0, 0], sizes = [1, 2, 128], strides = [1, 1, 1]} : vector<8x2x128xf32> to vector<1x2x128xf32>
    %32 = vector.shape_cast %31 : vector<1x2x128xf32> to vector<2x128xf32>
    %33 = arith.addf %30, %32 : vector<2x128xf32>
    %34 = arith.negf %33 : vector<2x128xf32>
    %35 = math.exp %34 : vector<2x128xf32>
    %cst_13 = arith.constant 1.000000e+00 : f32
    %36 = vector.broadcast %cst_13 : f32 to vector<2x128xf32>
    %37 = arith.addf %36, %35 : vector<2x128xf32>
    %38 = arith.divf %36, %37 : vector<2x128xf32>
    %39 = math.tanh %33 : vector<2x128xf32>
    %40 = vector.extract_strided_slice %38 {offsets = [0, 0], sizes = [2, 32], strides = [1, 1]} : vector<2x128xf32> to vector<2x32xf32>
    %41 = vector.extract_strided_slice %38 {offsets = [0, 32], sizes = [2, 32], strides = [1, 1]} : vector<2x128xf32> to vector<2x32xf32>
    %42 = vector.extract_strided_slice %39 {offsets = [0, 64], sizes = [2, 32], strides = [1, 1]} : vector<2x128xf32> to vector<2x32xf32>
    %43 = vector.extract_strided_slice %38 {offsets = [0, 96], sizes = [2, 32], strides = [1, 1]} : vector<2x128xf32> to vector<2x32xf32>
    %44 = arith.mulf %41, %27 : vector<2x32xf32>
    %45 = arith.mulf %40, %42 : vector<2x32xf32>
    %46 = arith.addf %44, %45 : vector<2x32xf32>
    %47 = math.tanh %46 : vector<2x32xf32>
    %48 = arith.mulf %43, %47 : vector<2x32xf32>
    %cst_14 = arith.constant dense<0.000000e+00> : vector<2x128xf32>
    %49 = tpu.matmul %48, %8, %cst_14 {dimension_numbers = #tpu.dot_dimension_numbers<[1], [0], [0], [1], [0, 0, 1, 1], [], []>} : vector<2x32xf32>, vector<32x128xf32>, vector<2x128xf32> -> vector<2x128xf32>
    %50 = vector.extract_strided_slice %7 {offsets = [2, 0, 0], sizes = [1, 2, 128], strides = [1, 1, 1]} : vector<8x2x128xf32> to vector<1x2x128xf32>
    %51 = vector.shape_cast %50 : vector<1x2x128xf32> to vector<2x128xf32>
    %52 = arith.addf %49, %51 : vector<2x128xf32>
    %53 = arith.negf %52 : vector<2x128xf32>
    %54 = math.exp %53 : vector<2x128xf32>
    %cst_15 = arith.constant 1.000000e+00 : f32
    %55 = vector.broadcast %cst_15 : f32 to vector<2x128xf32>
    %56 = arith.addf %55, %54 : vector<2x128xf32>
    %57 = arith.divf %55, %56 : vector<2x128xf32>
    %58 = math.tanh %52 : vector<2x128xf32>
    %59 = vector.extract_strided_slice %57 {offsets = [0, 0], sizes = [2, 32], strides = [1, 1]} : vector<2x128xf32> to vector<2x32xf32>
    %60 = vector.extract_strided_slice %57 {offsets = [0, 32], sizes = [2, 32], strides = [1, 1]} : vector<2x128xf32> to vector<2x32xf32>
    %61 = vector.extract_strided_slice %58 {offsets = [0, 64], sizes = [2, 32], strides = [1, 1]} : vector<2x128xf32> to vector<2x32xf32>
    %62 = vector.extract_strided_slice %57 {offsets = [0, 96], sizes = [2, 32], strides = [1, 1]} : vector<2x128xf32> to vector<2x32xf32>
    %63 = arith.mulf %60, %46 : vector<2x32xf32>
    %64 = arith.mulf %59, %61 : vector<2x32xf32>
    %65 = arith.addf %63, %64 : vector<2x32xf32>
    %66 = math.tanh %65 : vector<2x32xf32>
    %67 = arith.mulf %62, %66 : vector<2x32xf32>
    %cst_16 = arith.constant dense<0.000000e+00> : vector<2x128xf32>
    %68 = tpu.matmul %67, %8, %cst_16 {dimension_numbers = #tpu.dot_dimension_numbers<[1], [0], [0], [1], [0, 0, 1, 1], [], []>} : vector<2x32xf32>, vector<32x128xf32>, vector<2x128xf32> -> vector<2x128xf32>
    %69 = vector.extract_strided_slice %7 {offsets = [3, 0, 0], sizes = [1, 2, 128], strides = [1, 1, 1]} : vector<8x2x128xf32> to vector<1x2x128xf32>
    %70 = vector.shape_cast %69 : vector<1x2x128xf32> to vector<2x128xf32>
    %71 = arith.addf %68, %70 : vector<2x128xf32>
    %72 = arith.negf %71 : vector<2x128xf32>
    %73 = math.exp %72 : vector<2x128xf32>
    %cst_17 = arith.constant 1.000000e+00 : f32
    %74 = vector.broadcast %cst_17 : f32 to vector<2x128xf32>
    %75 = arith.addf %74, %73 : vector<2x128xf32>
    %76 = arith.divf %74, %75 : vector<2x128xf32>
    %77 = math.tanh %71 : vector<2x128xf32>
    %78 = vector.extract_strided_slice %76 {offsets = [0, 0], sizes = [2, 32], strides = [1, 1]} : vector<2x128xf32> to vector<2x32xf32>
    %79 = vector.extract_strided_slice %76 {offsets = [0, 32], sizes = [2, 32], strides = [1, 1]} : vector<2x128xf32> to vector<2x32xf32>
    %80 = vector.extract_strided_slice %77 {offsets = [0, 64], sizes = [2, 32], strides = [1, 1]} : vector<2x128xf32> to vector<2x32xf32>
    %81 = vector.extract_strided_slice %76 {offsets = [0, 96], sizes = [2, 32], strides = [1, 1]} : vector<2x128xf32> to vector<2x32xf32>
    %82 = arith.mulf %79, %65 : vector<2x32xf32>
    %83 = arith.mulf %78, %80 : vector<2x32xf32>
    %84 = arith.addf %82, %83 : vector<2x32xf32>
    %85 = math.tanh %84 : vector<2x32xf32>
    %86 = arith.mulf %81, %85 : vector<2x32xf32>
    %cst_18 = arith.constant dense<0.000000e+00> : vector<2x128xf32>
    %87 = tpu.matmul %86, %8, %cst_18 {dimension_numbers = #tpu.dot_dimension_numbers<[1], [0], [0], [1], [0, 0, 1, 1], [], []>} : vector<2x32xf32>, vector<32x128xf32>, vector<2x128xf32> -> vector<2x128xf32>
    %88 = vector.extract_strided_slice %7 {offsets = [4, 0, 0], sizes = [1, 2, 128], strides = [1, 1, 1]} : vector<8x2x128xf32> to vector<1x2x128xf32>
    %89 = vector.shape_cast %88 : vector<1x2x128xf32> to vector<2x128xf32>
    %90 = arith.addf %87, %89 : vector<2x128xf32>
    %91 = arith.negf %90 : vector<2x128xf32>
    %92 = math.exp %91 : vector<2x128xf32>
    %cst_19 = arith.constant 1.000000e+00 : f32
    %93 = vector.broadcast %cst_19 : f32 to vector<2x128xf32>
    %94 = arith.addf %93, %92 : vector<2x128xf32>
    %95 = arith.divf %93, %94 : vector<2x128xf32>
    %96 = math.tanh %90 : vector<2x128xf32>
    %97 = vector.extract_strided_slice %95 {offsets = [0, 0], sizes = [2, 32], strides = [1, 1]} : vector<2x128xf32> to vector<2x32xf32>
    %98 = vector.extract_strided_slice %95 {offsets = [0, 32], sizes = [2, 32], strides = [1, 1]} : vector<2x128xf32> to vector<2x32xf32>
    %99 = vector.extract_strided_slice %96 {offsets = [0, 64], sizes = [2, 32], strides = [1, 1]} : vector<2x128xf32> to vector<2x32xf32>
    %100 = vector.extract_strided_slice %95 {offsets = [0, 96], sizes = [2, 32], strides = [1, 1]} : vector<2x128xf32> to vector<2x32xf32>
    %101 = arith.mulf %98, %84 : vector<2x32xf32>
    %102 = arith.mulf %97, %99 : vector<2x32xf32>
    %103 = arith.addf %101, %102 : vector<2x32xf32>
    %104 = math.tanh %103 : vector<2x32xf32>
    %105 = arith.mulf %100, %104 : vector<2x32xf32>
    %cst_20 = arith.constant dense<0.000000e+00> : vector<2x128xf32>
    %106 = tpu.matmul %105, %8, %cst_20 {dimension_numbers = #tpu.dot_dimension_numbers<[1], [0], [0], [1], [0, 0, 1, 1], [], []>} : vector<2x32xf32>, vector<32x128xf32>, vector<2x128xf32> -> vector<2x128xf32>
    %107 = vector.extract_strided_slice %7 {offsets = [5, 0, 0], sizes = [1, 2, 128], strides = [1, 1, 1]} : vector<8x2x128xf32> to vector<1x2x128xf32>
    %108 = vector.shape_cast %107 : vector<1x2x128xf32> to vector<2x128xf32>
    %109 = arith.addf %106, %108 : vector<2x128xf32>
    %110 = arith.negf %109 : vector<2x128xf32>
    %111 = math.exp %110 : vector<2x128xf32>
    %cst_21 = arith.constant 1.000000e+00 : f32
    %112 = vector.broadcast %cst_21 : f32 to vector<2x128xf32>
    %113 = arith.addf %112, %111 : vector<2x128xf32>
    %114 = arith.divf %112, %113 : vector<2x128xf32>
    %115 = math.tanh %109 : vector<2x128xf32>
    %116 = vector.extract_strided_slice %114 {offsets = [0, 0], sizes = [2, 32], strides = [1, 1]} : vector<2x128xf32> to vector<2x32xf32>
    %117 = vector.extract_strided_slice %114 {offsets = [0, 32], sizes = [2, 32], strides = [1, 1]} : vector<2x128xf32> to vector<2x32xf32>
    %118 = vector.extract_strided_slice %115 {offsets = [0, 64], sizes = [2, 32], strides = [1, 1]} : vector<2x128xf32> to vector<2x32xf32>
    %119 = vector.extract_strided_slice %114 {offsets = [0, 96], sizes = [2, 32], strides = [1, 1]} : vector<2x128xf32> to vector<2x32xf32>
    %120 = arith.mulf %117, %103 : vector<2x32xf32>
    %121 = arith.mulf %116, %118 : vector<2x32xf32>
    %122 = arith.addf %120, %121 : vector<2x32xf32>
    %123 = math.tanh %122 : vector<2x32xf32>
    %124 = arith.mulf %119, %123 : vector<2x32xf32>
    %cst_22 = arith.constant dense<0.000000e+00> : vector<2x128xf32>
    %125 = tpu.matmul %124, %8, %cst_22 {dimension_numbers = #tpu.dot_dimension_numbers<[1], [0], [0], [1], [0, 0, 1, 1], [], []>} : vector<2x32xf32>, vector<32x128xf32>, vector<2x128xf32> -> vector<2x128xf32>
    %126 = vector.extract_strided_slice %7 {offsets = [6, 0, 0], sizes = [1, 2, 128], strides = [1, 1, 1]} : vector<8x2x128xf32> to vector<1x2x128xf32>
    %127 = vector.shape_cast %126 : vector<1x2x128xf32> to vector<2x128xf32>
    %128 = arith.addf %125, %127 : vector<2x128xf32>
    %129 = arith.negf %128 : vector<2x128xf32>
    %130 = math.exp %129 : vector<2x128xf32>
    %cst_23 = arith.constant 1.000000e+00 : f32
    %131 = vector.broadcast %cst_23 : f32 to vector<2x128xf32>
    %132 = arith.addf %131, %130 : vector<2x128xf32>
    %133 = arith.divf %131, %132 : vector<2x128xf32>
    %134 = math.tanh %128 : vector<2x128xf32>
    %135 = vector.extract_strided_slice %133 {offsets = [0, 0], sizes = [2, 32], strides = [1, 1]} : vector<2x128xf32> to vector<2x32xf32>
    %136 = vector.extract_strided_slice %133 {offsets = [0, 32], sizes = [2, 32], strides = [1, 1]} : vector<2x128xf32> to vector<2x32xf32>
    %137 = vector.extract_strided_slice %134 {offsets = [0, 64], sizes = [2, 32], strides = [1, 1]} : vector<2x128xf32> to vector<2x32xf32>
    %138 = vector.extract_strided_slice %133 {offsets = [0, 96], sizes = [2, 32], strides = [1, 1]} : vector<2x128xf32> to vector<2x32xf32>
    %139 = arith.mulf %136, %122 : vector<2x32xf32>
    %140 = arith.mulf %135, %137 : vector<2x32xf32>
    %141 = arith.addf %139, %140 : vector<2x32xf32>
    %142 = math.tanh %141 : vector<2x32xf32>
    %143 = arith.mulf %138, %142 : vector<2x32xf32>
    %cst_24 = arith.constant dense<0.000000e+00> : vector<2x128xf32>
    %144 = tpu.matmul %143, %8, %cst_24 {dimension_numbers = #tpu.dot_dimension_numbers<[1], [0], [0], [1], [0, 0, 1, 1], [], []>} : vector<2x32xf32>, vector<32x128xf32>, vector<2x128xf32> -> vector<2x128xf32>
    %145 = vector.extract_strided_slice %7 {offsets = [7, 0, 0], sizes = [1, 2, 128], strides = [1, 1, 1]} : vector<8x2x128xf32> to vector<1x2x128xf32>
    %146 = vector.shape_cast %145 : vector<1x2x128xf32> to vector<2x128xf32>
    %147 = arith.addf %144, %146 : vector<2x128xf32>
    %148 = arith.negf %147 : vector<2x128xf32>
    %149 = math.exp %148 : vector<2x128xf32>
    %cst_25 = arith.constant 1.000000e+00 : f32
    %150 = vector.broadcast %cst_25 : f32 to vector<2x128xf32>
    %151 = arith.addf %150, %149 : vector<2x128xf32>
    %152 = arith.divf %150, %151 : vector<2x128xf32>
    %153 = math.tanh %147 : vector<2x128xf32>
    %154 = vector.extract_strided_slice %152 {offsets = [0, 0], sizes = [2, 32], strides = [1, 1]} : vector<2x128xf32> to vector<2x32xf32>
    %155 = vector.extract_strided_slice %152 {offsets = [0, 32], sizes = [2, 32], strides = [1, 1]} : vector<2x128xf32> to vector<2x32xf32>
    %156 = vector.extract_strided_slice %153 {offsets = [0, 64], sizes = [2, 32], strides = [1, 1]} : vector<2x128xf32> to vector<2x32xf32>
    %157 = vector.extract_strided_slice %152 {offsets = [0, 96], sizes = [2, 32], strides = [1, 1]} : vector<2x128xf32> to vector<2x32xf32>
    %158 = arith.mulf %155, %141 : vector<2x32xf32>
    %159 = arith.mulf %154, %156 : vector<2x32xf32>
    %160 = arith.addf %158, %159 : vector<2x32xf32>
    %161 = math.tanh %160 : vector<2x32xf32>
    %162 = arith.mulf %157, %161 : vector<2x32xf32>
    %163 = vector.extract_strided_slice %143 {offsets = [1, 0], sizes = [1, 32], strides = [1, 1]} : vector<2x32xf32> to vector<1x32xf32>
    %164 = vector.extract_strided_slice %162 {offsets = [1, 0], sizes = [1, 32], strides = [1, 1]} : vector<2x32xf32> to vector<1x32xf32>
    %165 = tpu.concatenate %163, %164 in 0 : vector<1x32xf32>, vector<1x32xf32> -> vector<2x32xf32>
    %c0_26 = arith.constant 0 : index
    %c0_27 = arith.constant 0 : index
    %166 = vector.load %arg4[%c0_26, %c0_27] : memref<32x8xf32, #tpu.memory_space<vmem>>, vector<32x8xf32>
    %cst_28 = arith.constant dense<0.000000e+00> : vector<2x8xf32>
    %167 = tpu.matmul %165, %166, %cst_28 {dimension_numbers = #tpu.dot_dimension_numbers<[1], [0], [0], [1], [0, 0, 1, 1], [], []>} : vector<2x32xf32>, vector<32x8xf32>, vector<2x8xf32> -> vector<2x8xf32>
    %c0_29 = arith.constant 0 : index
    %c0_30 = arith.constant 0 : index
    %168 = vector.load %arg5[%c0_29, %c0_30] : memref<1x8xf32, #tpu.memory_space<vmem>>, vector<1x8xf32>
    %169 = vector.broadcast %168 : vector<1x8xf32> to vector<2x8xf32>
    %170 = arith.addf %167, %169 : vector<2x8xf32>
    %c0_31 = arith.constant 0 : index
    %c0_32 = arith.constant 0 : index
    %171 = vector.load %arg6[%c0_31, %c0_32] : memref<2x8xf32, #tpu.memory_space<vmem>>, vector<2x8xf32>
    tpu.vector_store %arg6[%c0_31, %c0_32], %170 {strides = array<i32>} : memref<2x8xf32, #tpu.memory_space<vmem>>, vector<2x8xf32>,
    return
  }
}

</mosaic_0001>

<llo_original>
// kernel: lstm_model_forward.1
$region0: #{lstm_model_forward.1}
  #allocation0 [shape = 'u32[]', space=smem, size = 0x4, offset = 0x4, fixed_abs, tag = 'smem constant byte address 0x4 - core index']
  #allocation1 [shape = 'u32[144,128]{1,0:T(1,128)}', space=vmem, size = 0x12000, scoped, tag = 'internal scratch']
  %s0 = inlined_call_operand.vmem [shape: f32[8,2,16], index: 0, kind: input, shape index: {}]
  %s1 = inlined_call_operand.vmem [shape: f32[16,128], index: 1, kind: input, shape index: {}]
  %s2 = inlined_call_operand.vmem [shape: f32[32,128], index: 2, kind: input, shape index: {}]
  %s3 = inlined_call_operand.vmem [shape: f32[1,128], index: 3, kind: input, shape index: {}]
  %s4 = inlined_call_operand.vmem [shape: f32[32,8], index: 4, kind: input, shape index: {}]
  %s5 = inlined_call_operand.vmem [shape: f32[1,8], index: 5, kind: input, shape index: {}]
  %s6 = inlined_call_operand.hbm [shape: f32[2,8], index: 6, kind: output, shape index: {}]
  %s7 = sld [smem:[#allocation0]]
  $region34: #{lstm_model_forward.1} parent=0
    _
  %s9 = ssub.s32 1, %s7
  %s10 = scalar_select 0, %s9, %s7
  $region1: #{lstm_model_forward.1} parent=0
    #allocation2 [shape = 'u8[1024]{0}', space=vmem, size = 0x400, scoped, tag = 'output window, operand 0, single buffered']
    #allocation3 [shape = 's32[1]{0}', space=sflag, size = 0x4, scoped, tag = 'scoped memory for lstm_model_forward.1']
    %11 = vsyncpa [#allocation3], 0
    // Predicated region
    $region2: #{lstm_model_forward.1} parent=1 // pred_check
      _
    $region3: #{lstm_model_forward.1} parent=1 // pred_check_branch
      %13 = sbr.rel (0) target = $region5
    $region4: #{lstm_model_forward.1} parent=1 // pred_region
      _
    $region5: #{lstm_model_forward.1} parent=1 // pred_fallthru
      _
    // Predicated region
    $region6: #{lstm_model_forward.1} parent=1 // pred_check
      _
    $region7: #{lstm_model_forward.1} parent=1 // pred_check_branch
      %15 = sbr.rel (0) target = $region9
    $region8: #{lstm_model_forward.1} parent=1 // pred_region
      _
    $region9: #{lstm_model_forward.1} parent=1 // pred_fallthru
      _
    // Predicated region
    $region10: #{lstm_model_forward.1} parent=1 // pred_check
      _
    $region11: #{lstm_model_forward.1} parent=1 // pred_check_branch
      %17 = sbr.rel (0) target = $region13
    $region12: #{lstm_model_forward.1} parent=1 // pred_region
      _
    $region13: #{lstm_model_forward.1} parent=1 // pred_fallthru
      _
    // Predicated region
    $region14: #{lstm_model_forward.1} parent=1 // pred_check
      _
    $region15: #{lstm_model_forward.1} parent=1 // pred_check_branch
      %19 = sbr.rel (0) target = $region17
    $region16: #{lstm_model_forward.1} parent=1 // pred_region
      _
    $region17: #{lstm_model_forward.1} parent=1 // pred_fallthru
      _
    // Predicated region
    $region18: #{lstm_model_forward.1} parent=1 // pred_check
      _
    $region19: #{lstm_model_forward.1} parent=1 // pred_check_branch
      %21 = sbr.rel (0) target = $region21
    $region20: #{lstm_model_forward.1} parent=1 // pred_region
      _
    $region21: #{lstm_model_forward.1} parent=1 // pred_fallthru
      _
    // Predicated region
    $region22: #{lstm_model_forward.1} parent=1 // pred_check
      _
    $region23: #{lstm_model_forward.1} parent=1 // pred_check_branch
      %23 = sbr.rel (0) target = $region25
    $region24: #{lstm_model_forward.1} parent=1 // pred_region
      _
    $region25: #{lstm_model_forward.1} parent=1 // pred_fallthru
      _
    %v24 = vld [vmem:[%s0] sm:$0x3]
    %v25 = vld [vmem:[%s0 + $0x2] sm:$0x3]
    %v26 = vld [vmem:[%s0 + $0x4] sm:$0x3]
    %v27 = vld [vmem:[%s0 + $0x6] sm:$0x3]
    %v28 = vld [vmem:[%s0 + $0x8] sm:$0x3]
    %v29 = vld [vmem:[%s0 + $0xa] sm:$0x3]
    %v30 = vld [vmem:[%s0 + $0xc] sm:$0x3]
    %v31 = vld [vmem:[%s0 + $0xe] sm:$0x3]
    %v32 = vld [vmem:[%s1] sm:$0xff]
    %v33 = vld [vmem:[%s1 + $0x8] sm:$0xff]
    %v34 = vld [vmem:[%s3] sm:$0x1]
    %v36 = vlaneseq
    %v37 = vshrl.u32 %v36, 7
    %v38 = vsub.s32 0, %v37
    %v39 = vrot.slane %v34, %v38
    %v49 = vcombine.low %v24, %v25
    %v50 = vcombine.low %v26, %v27
    %v52 = vunpack.c.l.s4 1983009808
    %v53 = vunpack.c.0.s8 %v52
    %v54 = vlaneseq
    %v55 = vshrl.u32 %v54, 7
    %v56 = vsub.s32 %v53, %v55
    %v57 = vrot.slane %v49, %v56
    %v59 = vunpack.c.l.s4 1983009808
    %v60 = vunpack.c.0.s8 %v59
    %v61 = vlaneseq
    %v62 = vshrl.u32 %v61, 7
    %v63 = vsub.s32 %v60, %v62
    %v64 = vrot.slane %v50, %v63
    %v65 = vcombine.low %v57, %v64
    %v66 = vcombine.low %v28, %v29
    %v67 = vcombine.low %v30, %v31
    %v69 = vunpack.c.l.s4 1983009808
    %v70 = vunpack.c.0.s8 %v69
    %v71 = vlaneseq
    %v72 = vshrl.u32 %v71, 7
    %v73 = vsub.s32 %v70, %v72
    %v74 = vrot.slane %v66, %v73
    %v76 = vunpack.c.l.s4 1983009808
    %v77 = vunpack.c.0.s8 %v76
    %v78 = vlaneseq
    %v79 = vshrl.u32 %v78, 7
    %v80 = vsub.s32 %v77, %v79
    %v81 = vrot.slane %v67, %v80
    %v82 = vcombine.low %v74, %v81
    %vm83 = vcmask 130048
    %v84 = vsel %vm83, %v65, 0
    %v86 = vsel %vm83, %v82, 0
    %88 = vmatprep.subr.mxu0 0.0
    %89 = vmatpush1.msra.mxu0 %v32
    %90 = vmatprep.subr.mxu0 0.0
    %91 = vmatpush1.msra.mxu0 %v33
    %92 = vmatprep.subr.mxu0 0.0
    %93 = vmatpush1.msra.mxu0 0.0
    %94 = vmatprep.subr.mxu0 0.0
    %95 = vmatpush1.msra.mxu0 0.0
    %96 = vmatprep.subr.mxu0 0.0
    %97 = vmatpush1.msra.mxu0 0.0
    %98 = vmatprep.subr.mxu0 0.0
    %99 = vmatpush1.msra.mxu0 0.0
    %100 = vmatprep.subr.mxu0 0.0
    %101 = vmatpush1.msra.mxu0 0.0
    %102 = vmatprep.subr.mxu0 0.0
    %103 = vmatpush1.msra.mxu0 0.0
    %104 = vmatprep.subr.mxu0 0.0
    %105 = vmatpush1.msra.mxu0 0.0
    %106 = vmatprep.subr.mxu0 0.0
    %107 = vmatpush1.msra.mxu0 0.0
    %108 = vmatprep.subr.mxu0 0.0
    %109 = vmatpush1.msra.mxu0 0.0
    %110 = vmatprep.subr.mxu0 0.0
    %111 = vmatpush1.msra.mxu0 0.0
    %112 = vmatprep.subr.mxu0 0.0
    %113 = vmatpush1.msra.mxu0 0.0
    %114 = vmatprep.subr.mxu0 0.0
    %115 = vmatpush1.msra.mxu0 0.0
    %116 = vmatprep.subr.mxu0 0.0
    %117 = vmatpush1.msra.mxu0 0.0
    %118 = vmatprep.subr.mxu0 0.0
    %119 = vmatpush1.msra.mxu0 0.0
    %120 = vmatprep.subr.mxu0 0.0
    %121 = vmatpush1.msra.mxu0 0.0
    %122 = vmatprep.subr.mxu0 0.0
    %123 = vmatpush1.msra.mxu0 0.0
    %124 = vmatprep.subr.mxu0 0.0
    %125 = vmatpush1.msra.mxu0 0.0
    %126 = vmatprep.subr.mxu0 0.0
    %127 = vmatpush1.msra.mxu0 0.0
    %128 = vmatprep.subr.mxu0 0.0
    %129 = vmatpush1.msra.mxu0 0.0
    %130 = vmatprep.subr.mxu0 0.0
    %131 = vmatpush1.msra.mxu0 0.0
    %132 = vmatprep.subr.mxu0 0.0
    %133 = vmatpush1.msra.mxu0 0.0
    %134 = vmatprep.subr.mxu0 0.0
    %135 = vmatpush1.msra.mxu0 0.0
    %136 = vmatprep.subr.mxu0 0.0
    %137 = vmatpush1.msra.mxu0 0.0
    %138 = vmatprep.subr.mxu0 0.0
    %139 = vmatpush1.msra.mxu0 0.0
    %140 = vmatprep.subr.mxu0 0.0
    %141 = vmatpush1.msra.mxu0 0.0
    %142 = vmatprep.subr.mxu0 0.0
    %143 = vmatpush1.msra.mxu0 0.0
    %144 = vmatprep.subr.mxu0 0.0
    %145 = vmatpush1.msra.mxu0 0.0
    %146 = vmatprep.subr.mxu0 0.0
    %147 = vmatpush1.msra.mxu0 0.0
    %148 = vmatprep.subr.mxu0 0.0
    %149 = vmatpush1.msra.mxu0 0.0
    %150 = vmatprep.subr.mxu0 0.0
    %151 = vmatpush1.msra.mxu0 0.0
    %152 = vmatprep.mubr.f32.mxu0 0.0
    %153 = vmatmul.mubr.f32.gmra.mrb[0].mxu0 %v84
    %v154 = vpop.f32.mrb[0].mxu0
    %v155 = vadd.f32 %v39, %v154
    %v156 = vpop.f32.mrb[0].mxu0
    %157 = vmatprep.mubr.f32.mxu0 0.0
    %158 = vmatmul.mubr.f32.gmra.mrb[0].mxu0 %v86
    %v159 = vpop.f32.mrb[0].mxu0
    %v160 = vadd.f32 %v39, %v159
    %v161 = vpop.f32.mrb[0].mxu0
    %162 = vdwg.mxu0
    %v165 = vcombine.high %v155, %v155
    %v167 = vunpack.c.l.s4 1983009808
    %v168 = vunpack.c.0.s8 %v167
    %v169 = vlaneseq
    %v170 = vshrl.u32 %v169, 7
    %v171 = vsub.s32 %v168, %v170
    %v172 = vrot.slane %v155, %v171
    %v174 = vunpack.c.l.s4 1983009808
    %v175 = vunpack.c.0.s8 %v174
    %v176 = vlaneseq
    %v177 = vshrl.u32 %v176, 7
    %v178 = vsub.s32 %v175, %v177
    %v179 = vrot.slane %v165, %v178
    %v180 = vcombine.high %v172, %v172
    %v181 = vcombine.high %v179, %v179
    %v182 = vcombine.high %v160, %v160
    %v184 = vunpack.c.l.s4 1983009808
    %v185 = vunpack.c.0.s8 %v184
    %v186 = vlaneseq
    %v187 = vshrl.u32 %v186, 7
    %v188 = vsub.s32 %v185, %v187
    %v189 = vrot.slane %v160, %v188
    %v191 = vunpack.c.l.s4 1983009808
    %v192 = vunpack.c.0.s8 %v191
    %v193 = vlaneseq
    %v194 = vshrl.u32 %v193, 7
    %v195 = vsub.s32 %v192, %v194
    %v196 = vrot.slane %v182, %v195
    %v197 = vcombine.high %v189, %v189
    %v198 = vcombine.high %v196, %v196
    %v207 = vld [vmem:[%s2] sm:$0xff]
    %v208 = vld [vmem:[%s2 + $0x8] sm:$0xff]
    %v209 = vld [vmem:[%s2 + $0x10] sm:$0xff]
    %v210 = vld [vmem:[%s2 + $0x18] sm:$0xff]
    %vm211 = vcmask 261120
    %v213 = vsel %vm211, 0.0, 0
    %215 = vmatprep.subr.mxu0 0.0
    %216 = vmatpush1.msra.mxu0 %v207
    %217 = vmatprep.subr.mxu0 0.0
    %218 = vmatpush1.msra.mxu0 %v208
    %219 = vmatprep.subr.mxu0 0.0
    %220 = vmatpush1.msra.mxu0 %v209
    %221 = vmatprep.subr.mxu0 0.0
    %222 = vmatpush1.msra.mxu0 %v210
    %223 = vmatprep.subr.mxu0 0.0
    %224 = vmatpush1.msra.mxu0 0.0
    %225 = vmatprep.subr.mxu0 0.0
    %226 = vmatpush1.msra.mxu0 0.0
    %227 = vmatprep.subr.mxu0 0.0
    %228 = vmatpush1.msra.mxu0 0.0
    %229 = vmatprep.subr.mxu0 0.0
    %230 = vmatpush1.msra.mxu0 0.0
    %231 = vmatprep.subr.mxu0 0.0
    %232 = vmatpush1.msra.mxu0 0.0
    %233 = vmatprep.subr.mxu0 0.0
    %234 = vmatpush1.msra.mxu0 0.0
    %235 = vmatprep.subr.mxu0 0.0
    %236 = vmatpush1.msra.mxu0 0.0
    %237 = vmatprep.subr.mxu0 0.0
    %238 = vmatpush1.msra.mxu0 0.0
    %239 = vmatprep.subr.mxu0 0.0
    %240 = vmatpush1.msra.mxu0 0.0
    %241 = vmatprep.subr.mxu0 0.0
    %242 = vmatpush1.msra.mxu0 0.0
    %243 = vmatprep.subr.mxu0 0.0
    %244 = vmatpush1.msra.mxu0 0.0
    %245 = vmatprep.subr.mxu0 0.0
    %246 = vmatpush1.msra.mxu0 0.0
    %247 = vmatprep.subr.mxu0 0.0
    %248 = vmatpush1.msra.mxu0 0.0
    %249 = vmatprep.subr.mxu0 0.0
    %250 = vmatpush1.msra.mxu0 0.0
    %251 = vmatprep.subr.mxu0 0.0
    %252 = vmatpush1.msra.mxu0 0.0
    %253 = vmatprep.subr.mxu0 0.0
    %254 = vmatpush1.msra.mxu0 0.0
    %255 = vmatprep.subr.mxu0 0.0
    %256 = vmatpush1.msra.mxu0 0.0
    %257 = vmatprep.subr.mxu0 0.0
    %258 = vmatpush1.msra.mxu0 0.0
    %259 = vmatprep.subr.mxu0 0.0
    %260 = vmatpush1.msra.mxu0 0.0
    %261 = vmatprep.subr.mxu0 0.0
    %262 = vmatpush1.msra.mxu0 0.0
    %263 = vmatprep.subr.mxu0 0.0
    %264 = vmatpush1.msra.mxu0 0.0
    %265 = vmatprep.subr.mxu0 0.0
    %266 = vmatpush1.msra.mxu0 0.0
    %267 = vmatprep.subr.mxu0 0.0
    %268 = vmatpush1.msra.mxu0 0.0
    %269 = vmatprep.subr.mxu0 0.0
    %270 = vmatpush1.msra.mxu0 0.0
    %271 = vmatprep.subr.mxu0 0.0
    %272 = vmatpush1.msra.mxu0 0.0
    %273 = vmatprep.subr.mxu0 0.0
    %274 = vmatpush1.msra.mxu0 0.0
    %275 = vmatprep.subr.mxu0 0.0
    %276 = vmatpush1.msra.mxu0 0.0
    %277 = vmatprep.subr.mxu0 0.0
    %278 = vmatpush1.msra.mxu0 0.0
    %279 = vmatprep.mubr.f32.mxu0 0.0
    %280 = vmatmul.mubr.f32.gmra.mrb[0].mxu0 %v213
    %v281 = vpop.f32.mrb[0].mxu0
    %v282 = vadd.f32 %v172, %v281
    %v283 = vpop.f32.mrb[0].mxu0
    %284 = vdwg.mxu0
    %v285 = vxor.u32 %v282, 2147483648
    %v286 = vmul.f32 %v285, 1.442695
    %v287 = vpow.pop %v286
    %v288 = vadd.f32 %v287, 1.0
    %v289 = vrcp.pop %v288
    %v290 = vmul.f32 1.0, %v289
    %v291 = vtanh.pop %v282
    %v292 = vmul.f32 %v290, 0.0
    %294 = vrot.lane.b32.xlu0 %v291, 64
    %v295 = vpop.permute.xlu0 %294
    %v297 = vmul.f32 %v290, %v295
    %299 = vrot.lane.b32.xlu0 %v297, 32
    %v300 = vpop.permute.xlu0 %299
    %v302 = vadd.f32 %v292, %v300
    %v303 = vtanh.pop %v302
    %305 = vrot.lane.b32.xlu0 %v303, 64
    %v306 = vpop.permute.xlu0 %305
    %v308 = vmul.f32 %v290, %v306
    %310 = vrot.lane.b32.xlu0 %v308, 32
    %v311 = vpop.permute.xlu0 %310
    %v312 = vsel %vm211, %v311, 0
    %314 = vmatprep.subr.mxu0 0.0
    %315 = vmatpush1.msra.mxu0 %v207
    %316 = vmatprep.subr.mxu0 0.0
    %317 = vmatpush1.msra.mxu0 %v208
    %318 = vmatprep.subr.mxu0 0.0
    %319 = vmatpush1.msra.mxu0 %v209
    %320 = vmatprep.subr.mxu0 0.0
    %321 = vmatpush1.msra.mxu0 %v210
    %322 = vmatprep.subr.mxu0 0.0
    %323 = vmatpush1.msra.mxu0 0.0
    %324 = vmatprep.subr.mxu0 0.0
    %325 = vmatpush1.msra.mxu0 0.0
    %326 = vmatprep.subr.mxu0 0.0
    %327 = vmatpush1.msra.mxu0 0.0
    %328 = vmatprep.subr.mxu0 0.0
    %329 = vmatpush1.msra.mxu0 0.0
    %330 = vmatprep.subr.mxu0 0.0
    %331 = vmatpush1.msra.mxu0 0.0
    %332 = vmatprep.subr.mxu0 0.0
    %333 = vmatpush1.msra.mxu0 0.0
    %334 = vmatprep.subr.mxu0 0.0
    %335 = vmatpush1.msra.mxu0 0.0
    %336 = vmatprep.subr.mxu0 0.0
    %337 = vmatpush1.msra.mxu0 0.0
    %338 = vmatprep.subr.mxu0 0.0
    %339 = vmatpush1.msra.mxu0 0.0
    %340 = vmatprep.subr.mxu0 0.0
    %341 = vmatpush1.msra.mxu0 0.0
    %342 = vmatprep.subr.mxu0 0.0
    %343 = vmatpush1.msra.mxu0 0.0
    %344 = vmatprep.subr.mxu0 0.0
    %345 = vmatpush1.msra.mxu0 0.0
    %346 = vmatprep.subr.mxu0 0.0
    %347 = vmatpush1.msra.mxu0 0.0
    %348 = vmatprep.subr.mxu0 0.0
    %349 = vmatpush1.msra.mxu0 0.0
    %350 = vmatprep.subr.mxu0 0.0
    %351 = vmatpush1.msra.mxu0 0.0
    %352 = vmatprep.subr.mxu0 0.0
    %353 = vmatpush1.msra.mxu0 0.0
    %354 = vmatprep.subr.mxu0 0.0
    %355 = vmatpush1.msra.mxu0 0.0
    %356 = vmatprep.subr.mxu0 0.0
    %357 = vmatpush1.msra.mxu0 0.0
    %358 = vmatprep.subr.mxu0 0.0
    %359 = vmatpush1.msra.mxu0 0.0
    %360 = vmatprep.subr.mxu0 0.0
    %361 = vmatpush1.msra.mxu0 0.0
    %362 = vmatprep.subr.mxu0 0.0
    %363 = vmatpush1.msra.mxu0 0.0
    %364 = vmatprep.subr.mxu0 0.0
    %365 = vmatpush1.msra.mxu0 0.0
    %366 = vmatprep.subr.mxu0 0.0
    %367 = vmatpush1.msra.mxu0 0.0
    %368 = vmatprep.subr.mxu0 0.0
    %369 = vmatpush1.msra.mxu0 0.0
    %370 = vmatprep.subr.mxu0 0.0
    %371 = vmatpush1.msra.mxu0 0.0
    %372 = vmatprep.subr.mxu0 0.0
    %373 = vmatpush1.msra.mxu0 0.0
    %374 = vmatprep.subr.mxu0 0.0
    %375 = vmatpush1.msra.mxu0 0.0
    %376 = vmatprep.subr.mxu0 0.0
    %377 = vmatpush1.msra.mxu0 0.0
    %378 = vmatprep.mubr.f32.mxu0 0.0
    %379 = vmatmul.mubr.f32.gmra.mrb[0].mxu0 %v312
    %v380 = vpop.f32.mrb[0].mxu0
    %v381 = vadd.f32 %v180, %v380
    %v382 = vpop.f32.mrb[0].mxu0
    %383 = vdwg.mxu0
    %v384 = vxor.u32 %v381, 2147483648
    %v385 = vmul.f32 %v384, 1.442695
    %v386 = vpow.pop %v385
    %v387 = vadd.f32 %v386, 1.0
    %v388 = vrcp.pop %v387
    %v389 = vmul.f32 1.0, %v388
    %v390 = vtanh.pop %v381
    %v391 = vmul.f32 %v389, %v302
    %393 = vrot.lane.b32.xlu0 %v390, 64
    %v394 = vpop.permute.xlu0 %393
    %v396 = vmul.f32 %v389, %v394
    %398 = vrot.lane.b32.xlu0 %v396, 32
    %v399 = vpop.permute.xlu0 %398
    %v401 = vadd.f32 %v391, %v399
    %v402 = vtanh.pop %v401
    %404 = vrot.lane.b32.xlu0 %v402, 64
    %v405 = vpop.permute.xlu0 %404
    %v407 = vmul.f32 %v389, %v405
    %409 = vrot.lane.b32.xlu0 %v407, 32
    %v410 = vpop.permute.xlu0 %409
    %v411 = vsel %vm211, %v410, 0
    %413 = vmatprep.subr.mxu0 0.0
    %414 = vmatpush1.msra.mxu0 %v207
    %415 = vmatprep.subr.mxu0 0.0
    %416 = vmatpush1.msra.mxu0 %v208
    %417 = vmatprep.subr.mxu0 0.0
    %418 = vmatpush1.msra.mxu0 %v209
    %419 = vmatprep.subr.mxu0 0.0
    %420 = vmatpush1.msra.mxu0 %v210
    %421 = vmatprep.subr.mxu0 0.0
    %422 = vmatpush1.msra.mxu0 0.0
    %423 = vmatprep.subr.mxu0 0.0
    %424 = vmatpush1.msra.mxu0 0.0
    %425 = vmatprep.subr.mxu0 0.0
    %426 = vmatpush1.msra.mxu0 0.0
    %427 = vmatprep.subr.mxu0 0.0
    %428 = vmatpush1.msra.mxu0 0.0
    %429 = vmatprep.subr.mxu0 0.0
    %430 = vmatpush1.msra.mxu0 0.0
    %431 = vmatprep.subr.mxu0 0.0
    %432 = vmatpush1.msra.mxu0 0.0
    %433 = vmatprep.subr.mxu0 0.0
    %434 = vmatpush1.msra.mxu0 0.0
    %435 = vmatprep.subr.mxu0 0.0
    %436 = vmatpush1.msra.mxu0 0.0
    %437 = vmatprep.subr.mxu0 0.0
    %438 = vmatpush1.msra.mxu0 0.0
    %439 = vmatprep.subr.mxu0 0.0
    %440 = vmatpush1.msra.mxu0 0.0
    %441 = vmatprep.subr.mxu0 0.0
    %442 = vmatpush1.msra.mxu0 0.0
    %443 = vmatprep.subr.mxu0 0.0
    %444 = vmatpush1.msra.mxu0 0.0
    %445 = vmatprep.subr.mxu0 0.0
    %446 = vmatpush1.msra.mxu0 0.0
    %447 = vmatprep.subr.mxu0 0.0
    %448 = vmatpush1.msra.mxu0 0.0
    %449 = vmatprep.subr.mxu0 0.0
    %450 = vmatpush1.msra.mxu0 0.0
    %451 = vmatprep.subr.mxu0 0.0
    %452 = vmatpush1.msra.mxu0 0.0
    %453 = vmatprep.subr.mxu0 0.0
    %454 = vmatpush1.msra.mxu0 0.0
    %455 = vmatprep.subr.mxu0 0.0
    %456 = vmatpush1.msra.mxu0 0.0
    %457 = vmatprep.subr.mxu0 0.0
    %458 = vmatpush1.msra.mxu0 0.0
    %459 = vmatprep.subr.mxu0 0.0
    %460 = vmatpush1.msra.mxu0 0.0
    %461 = vmatprep.subr.mxu0 0.0
    %462 = vmatpush1.msra.mxu0 0.0
    %463 = vmatprep.subr.mxu0 0.0
    %464 = vmatpush1.msra.mxu0 0.0
    %465 = vmatprep.subr.mxu0 0.0
    %466 = vmatpush1.msra.mxu0 0.0
    %467 = vmatprep.subr.mxu0 0.0
    %468 = vmatpush1.msra.mxu0 0.0
    %469 = vmatprep.subr.mxu0 0.0
    %470 = vmatpush1.msra.mxu0 0.0
    %471 = vmatprep.subr.mxu0 0.0
    %472 = vmatpush1.msra.mxu0 0.0
    %473 = vmatprep.subr.mxu0 0.0
    %474 = vmatpush1.msra.mxu0 0.0
    %475 = vmatprep.subr.mxu0 0.0
    %476 = vmatpush1.msra.mxu0 0.0
    %477 = vmatprep.mubr.f32.mxu0 0.0
    %478 = vmatmul.mubr.f32.gmra.mrb[0].mxu0 %v411
    %v479 = vpop.f32.mrb[0].mxu0
    %v480 = vadd.f32 %v179, %v479
    %v481 = vpop.f32.mrb[0].mxu0
    %482 = vdwg.mxu0
    %v483 = vxor.u32 %v480, 2147483648
    %v484 = vmul.f32 %v483, 1.442695
    %v485 = vpow.pop %v484
    %v486 = vadd.f32 %v485, 1.0
    %v487 = vrcp.pop %v486
    %v488 = vmul.f32 1.0, %v487
    %v489 = vtanh.pop %v480
    %v490 = vmul.f32 %v488, %v401
    %492 = vrot.lane.b32.xlu0 %v489, 64
    %v493 = vpop.permute.xlu0 %492
    %v495 = vmul.f32 %v488, %v493
    %497 = vrot.lane.b32.xlu0 %v495, 32
    %v498 = vpop.permute.xlu0 %497
    %v500 = vadd.f32 %v490, %v498
    %v501 = vtanh.pop %v500
    %503 = vrot.lane.b32.xlu0 %v501, 64
    %v504 = vpop.permute.xlu0 %503
    %v506 = vmul.f32 %v488, %v504
    %508 = vrot.lane.b32.xlu0 %v506, 32
    %v509 = vpop.permute.xlu0 %508
    %v510 = vsel %vm211, %v509, 0
    %512 = vmatprep.subr.mxu0 0.0
    %513 = vmatpush1.msra.mxu0 %v207
    %514 = vmatprep.subr.mxu0 0.0
    %515 = vmatpush1.msra.mxu0 %v208
    %516 = vmatprep.subr.mxu0 0.0
    %517 = vmatpush1.msra.mxu0 %v209
    %518 = vmatprep.subr.mxu0 0.0
    %519 = vmatpush1.msra.mxu0 %v210
    %520 = vmatprep.subr.mxu0 0.0
    %521 = vmatpush1.msra.mxu0 0.0
    %522 = vmatprep.subr.mxu0 0.0
    %523 = vmatpush1.msra.mxu0 0.0
    %524 = vmatprep.subr.mxu0 0.0
    %525 = vmatpush1.msra.mxu0 0.0
    %526 = vmatprep.subr.mxu0 0.0
    %527 = vmatpush1.msra.mxu0 0.0
    %528 = vmatprep.subr.mxu0 0.0
    %529 = vmatpush1.msra.mxu0 0.0
    %530 = vmatprep.subr.mxu0 0.0
    %531 = vmatpush1.msra.mxu0 0.0
    %532 = vmatprep.subr.mxu0 0.0
    %533 = vmatpush1.msra.mxu0 0.0
    %534 = vmatprep.subr.mxu0 0.0
    %535 = vmatpush1.msra.mxu0 0.0
    %536 = vmatprep.subr.mxu0 0.0
    %537 = vmatpush1.msra.mxu0 0.0
    %538 = vmatprep.subr.mxu0 0.0
    %539 = vmatpush1.msra.mxu0 0.0
    %540 = vmatprep.subr.mxu0 0.0
    %541 = vmatpush1.msra.mxu0 0.0
    %542 = vmatprep.subr.mxu0 0.0
    %543 = vmatpush1.msra.mxu0 0.0
    %544 = vmatprep.subr.mxu0 0.0
    %545 = vmatpush1.msra.mxu0 0.0
    %546 = vmatprep.subr.mxu0 0.0
    %547 = vmatpush1.msra.mxu0 0.0
    %548 = vmatprep.subr.mxu0 0.0
    %549 = vmatpush1.msra.mxu0 0.0
    %550 = vmatprep.subr.mxu0 0.0
    %551 = vmatpush1.msra.mxu0 0.0
    %552 = vmatprep.subr.mxu0 0.0
    %553 = vmatpush1.msra.mxu0 0.0
    %554 = vmatprep.subr.mxu0 0.0
    %555 = vmatpush1.msra.mxu0 0.0
    %556 = vmatprep.subr.mxu0 0.0
    %557 = vmatpush1.msra.mxu0 0.0
    %558 = vmatprep.subr.mxu0 0.0
    %559 = vmatpush1.msra.mxu0 0.0
    %560 = vmatprep.subr.mxu0 0.0
    %561 = vmatpush1.msra.mxu0 0.0
    %562 = vmatprep.subr.mxu0 0.0
    %563 = vmatpush1.msra.mxu0 0.0
    %564 = vmatprep.subr.mxu0 0.0
    %565 = vmatpush1.msra.mxu0 0.0
    %566 = vmatprep.subr.mxu0 0.0
    %567 = vmatpush1.msra.mxu0 0.0
    %568 = vmatprep.subr.mxu0 0.0
    %569 = vmatpush1.msra.mxu0 0.0
    %570 = vmatprep.subr.mxu0 0.0
    %571 = vmatpush1.msra.mxu0 0.0
    %572 = vmatprep.subr.mxu0 0.0
    %573 = vmatpush1.msra.mxu0 0.0
    %574 = vmatprep.subr.mxu0 0.0
    %575 = vmatpush1.msra.mxu0 0.0
    %576 = vmatprep.mubr.f32.mxu0 0.0
    %577 = vmatmul.mubr.f32.gmra.mrb[0].mxu0 %v510
    %v578 = vpop.f32.mrb[0].mxu0
    %v579 = vadd.f32 %v181, %v578
    %v580 = vpop.f32.mrb[0].mxu0
    %581 = vdwg.mxu0
    %v582 = vxor.u32 %v579, 2147483648
    %v583 = vmul.f32 %v582, 1.442695
    %v584 = vpow.pop %v583
    %v585 = vadd.f32 %v584, 1.0
    %v586 = vrcp.pop %v585
    %v587 = vmul.f32 1.0, %v586
    %v588 = vtanh.pop %v579
    %v589 = vmul.f32 %v587, %v500
    %591 = vrot.lane.b32.xlu0 %v588, 64
    %v592 = vpop.permute.xlu0 %591
    %v594 = vmul.f32 %v587, %v592
    %596 = vrot.lane.b32.xlu0 %v594, 32
    %v597 = vpop.permute.xlu0 %596
    %v599 = vadd.f32 %v589, %v597
    %v600 = vtanh.pop %v599
    %602 = vrot.lane.b32.xlu0 %v600, 64
    %v603 = vpop.permute.xlu0 %602
    %v605 = vmul.f32 %v587, %v603
    %607 = vrot.lane.b32.xlu0 %v605, 32
    %v608 = vpop.permute.xlu0 %607
    %v609 = vsel %vm211, %v608, 0
    %611 = vmatprep.subr.mxu0 0.0
    %612 = vmatpush1.msra.mxu0 %v207
    %613 = vmatprep.subr.mxu0 0.0
    %614 = vmatpush1.msra.mxu0 %v208
    %615 = vmatprep.subr.mxu0 0.0
    %616 = vmatpush1.msra.mxu0 %v209
    %617 = vmatprep.subr.mxu0 0.0
    %618 = vmatpush1.msra.mxu0 %v210
    %619 = vmatprep.subr.mxu0 0.0
    %620 = vmatpush1.msra.mxu0 0.0
    %621 = vmatprep.subr.mxu0 0.0
    %622 = vmatpush1.msra.mxu0 0.0
    %623 = vmatprep.subr.mxu0 0.0
    %624 = vmatpush1.msra.mxu0 0.0
    %625 = vmatprep.subr.mxu0 0.0
    %626 = vmatpush1.msra.mxu0 0.0
    %627 = vmatprep.subr.mxu0 0.0
    %628 = vmatpush1.msra.mxu0 0.0
    %629 = vmatprep.subr.mxu0 0.0
    %630 = vmatpush1.msra.mxu0 0.0
    %631 = vmatprep.subr.mxu0 0.0
    %632 = vmatpush1.msra.mxu0 0.0
    %633 = vmatprep.subr.mxu0 0.0
    %634 = vmatpush1.msra.mxu0 0.0
    %635 = vmatprep.subr.mxu0 0.0
    %636 = vmatpush1.msra.mxu0 0.0
    %637 = vmatprep.subr.mxu0 0.0
    %638 = vmatpush1.msra.mxu0 0.0
    %639 = vmatprep.subr.mxu0 0.0
    %640 = vmatpush1.msra.mxu0 0.0
    %641 = vmatprep.subr.mxu0 0.0
    %642 = vmatpush1.msra.mxu0 0.0
    %643 = vmatprep.subr.mxu0 0.0
    %644 = vmatpush1.msra.mxu0 0.0
    %645 = vmatprep.subr.mxu0 0.0
    %646 = vmatpush1.msra.mxu0 0.0
    %647 = vmatprep.subr.mxu0 0.0
    %648 = vmatpush1.msra.mxu0 0.0
    %649 = vmatprep.subr.mxu0 0.0
    %650 = vmatpush1.msra.mxu0 0.0
    %651 = vmatprep.subr.mxu0 0.0
    %652 = vmatpush1.msra.mxu0 0.0
    %653 = vmatprep.subr.mxu0 0.0
    %654 = vmatpush1.msra.mxu0 0.0
    %655 = vmatprep.subr.mxu0 0.0
    %656 = vmatpush1.msra.mxu0 0.0
    %657 = vmatprep.subr.mxu0 0.0
    %658 = vmatpush1.msra.mxu0 0.0
    %659 = vmatprep.subr.mxu0 0.0
    %660 = vmatpush1.msra.mxu0 0.0
    %661 = vmatprep.subr.mxu0 0.0
    %662 = vmatpush1.msra.mxu0 0.0
    %663 = vmatprep.subr.mxu0 0.0
    %664 = vmatpush1.msra.mxu0 0.0
    %665 = vmatprep.subr.mxu0 0.0
    %666 = vmatpush1.msra.mxu0 0.0
    %667 = vmatprep.subr.mxu0 0.0
    %668 = vmatpush1.msra.mxu0 0.0
    %669 = vmatprep.subr.mxu0 0.0
    %670 = vmatpush1.msra.mxu0 0.0
    %671 = vmatprep.subr.mxu0 0.0
    %672 = vmatpush1.msra.mxu0 0.0
    %673 = vmatprep.subr.mxu0 0.0
    %674 = vmatpush1.msra.mxu0 0.0
    %675 = vmatprep.mubr.f32.mxu0 0.0
    %676 = vmatmul.mubr.f32.gmra.mrb[0].mxu0 %v609
    %v677 = vpop.f32.mrb[0].mxu0
    %v678 = vadd.f32 %v189, %v677
    %v679 = vpop.f32.mrb[0].mxu0
    %680 = vdwg.mxu0
    %v681 = vxor.u32 %v678, 2147483648
    %v682 = vmul.f32 %v681, 1.442695
    %v683 = vpow.pop %v682
    %v684 = vadd.f32 %v683, 1.0
    %v685 = vrcp.pop %v684
    %v686 = vmul.f32 1.0, %v685
    %v687 = vtanh.pop %v678
    %v688 = vmul.f32 %v686, %v599
    %690 = vrot.lane.b32.xlu0 %v687, 64
    %v691 = vpop.permute.xlu0 %690
    %v693 = vmul.f32 %v686, %v691
    %695 = vrot.lane.b32.xlu0 %v693, 32
    %v696 = vpop.permute.xlu0 %695
    %v698 = vadd.f32 %v688, %v696
    %v699 = vtanh.pop %v698
    %701 = vrot.lane.b32.xlu0 %v699, 64
    %v702 = vpop.permute.xlu0 %701
    %v704 = vmul.f32 %v686, %v702
    %706 = vrot.lane.b32.xlu0 %v704, 32
    %v707 = vpop.permute.xlu0 %706
    %v708 = vsel %vm211, %v707, 0
    %710 = vmatprep.subr.mxu0 0.0
    %711 = vmatpush1.msra.mxu0 %v207
    %712 = vmatprep.subr.mxu0 0.0
    %713 = vmatpush1.msra.mxu0 %v208
    %714 = vmatprep.subr.mxu0 0.0
    %715 = vmatpush1.msra.mxu0 %v209
    %716 = vmatprep.subr.mxu0 0.0
    %717 = vmatpush1.msra.mxu0 %v210
    %718 = vmatprep.subr.mxu0 0.0
    %719 = vmatpush1.msra.mxu0 0.0
    %720 = vmatprep.subr.mxu0 0.0
    %721 = vmatpush1.msra.mxu0 0.0
    %722 = vmatprep.subr.mxu0 0.0
    %723 = vmatpush1.msra.mxu0 0.0
    %724 = vmatprep.subr.mxu0 0.0
    %725 = vmatpush1.msra.mxu0 0.0
    %726 = vmatprep.subr.mxu0 0.0
    %727 = vmatpush1.msra.mxu0 0.0
    %728 = vmatprep.subr.mxu0 0.0
    %729 = vmatpush1.msra.mxu0 0.0
    %730 = vmatprep.subr.mxu0 0.0
    %731 = vmatpush1.msra.mxu0 0.0
    %732 = vmatprep.subr.mxu0 0.0
    %733 = vmatpush1.msra.mxu0 0.0
    %734 = vmatprep.subr.mxu0 0.0
    %735 = vmatpush1.msra.mxu0 0.0
    %736 = vmatprep.subr.mxu0 0.0
    %737 = vmatpush1.msra.mxu0 0.0
    %738 = vmatprep.subr.mxu0 0.0
    %739 = vmatpush1.msra.mxu0 0.0
    %740 = vmatprep.subr.mxu0 0.0
    %741 = vmatpush1.msra.mxu0 0.0
    %742 = vmatprep.subr.mxu0 0.0
    %743 = vmatpush1.msra.mxu0 0.0
    %744 = vmatprep.subr.mxu0 0.0
    %745 = vmatpush1.msra.mxu0 0.0
    %746 = vmatprep.subr.mxu0 0.0
    %747 = vmatpush1.msra.mxu0 0.0
    %748 = vmatprep.subr.mxu0 0.0
    %749 = vmatpush1.msra.mxu0 0.0
    %750 = vmatprep.subr.mxu0 0.0
    %751 = vmatpush1.msra.mxu0 0.0
    %752 = vmatprep.subr.mxu0 0.0
    %753 = vmatpush1.msra.mxu0 0.0
    %754 = vmatprep.subr.mxu0 0.0
    %755 = vmatpush1.msra.mxu0 0.0
    %756 = vmatprep.subr.mxu0 0.0
    %757 = vmatpush1.msra.mxu0 0.0
    %758 = vmatprep.subr.mxu0 0.0
    %759 = vmatpush1.msra.mxu0 0.0
    %760 = vmatprep.subr.mxu0 0.0
    %761 = vmatpush1.msra.mxu0 0.0
    %762 = vmatprep.subr.mxu0 0.0
    %763 = vmatpush1.msra.mxu0 0.0
    %764 = vmatprep.subr.mxu0 0.0
    %765 = vmatpush1.msra.mxu0 0.0
    %766 = vmatprep.subr.mxu0 0.0
    %767 = vmatpush1.msra.mxu0 0.0
    %768 = vmatprep.subr.mxu0 0.0
    %769 = vmatpush1.msra.mxu0 0.0
    %770 = vmatprep.subr.mxu0 0.0
    %771 = vmatpush1.msra.mxu0 0.0
    %772 = vmatprep.subr.mxu0 0.0
    %773 = vmatpush1.msra.mxu0 0.0
    %774 = vmatprep.mubr.f32.mxu0 0.0
    %775 = vmatmul.mubr.f32.gmra.mrb[0].mxu0 %v708
    %v776 = vpop.f32.mrb[0].mxu0
    %v777 = vadd.f32 %v197, %v776
    %v778 = vpop.f32.mrb[0].mxu0
    %779 = vdwg.mxu0
    %v780 = vxor.u32 %v777, 2147483648
    %v781 = vmul.f32 %v780, 1.442695
    %v782 = vpow.pop %v781
    %v783 = vadd.f32 %v782, 1.0
    %v784 = vrcp.pop %v783
    %v785 = vmul.f32 1.0, %v784
    %v786 = vtanh.pop %v777
    %v787 = vmul.f32 %v785, %v698
    %789 = vrot.lane.b32.xlu0 %v786, 64
    %v790 = vpop.permute.xlu0 %789
    %v792 = vmul.f32 %v785, %v790
    %794 = vrot.lane.b32.xlu0 %v792, 32
    %v795 = vpop.permute.xlu0 %794
    %v797 = vadd.f32 %v787, %v795
    %v798 = vtanh.pop %v797
    %800 = vrot.lane.b32.xlu0 %v798, 64
    %v801 = vpop.permute.xlu0 %800
    %v803 = vmul.f32 %v785, %v801
    %805 = vrot.lane.b32.xlu0 %v803, 32
    %v806 = vpop.permute.xlu0 %805
    %v807 = vsel %vm211, %v806, 0
    %809 = vmatprep.subr.mxu0 0.0
    %810 = vmatpush1.msra.mxu0 %v207
    %811 = vmatprep.subr.mxu0 0.0
    %812 = vmatpush1.msra.mxu0 %v208
    %813 = vmatprep.subr.mxu0 0.0
    %814 = vmatpush1.msra.mxu0 %v209
    %815 = vmatprep.subr.mxu0 0.0
    %816 = vmatpush1.msra.mxu0 %v210
    %817 = vmatprep.subr.mxu0 0.0
    %818 = vmatpush1.msra.mxu0 0.0
    %819 = vmatprep.subr.mxu0 0.0
    %820 = vmatpush1.msra.mxu0 0.0
    %821 = vmatprep.subr.mxu0 0.0
    %822 = vmatpush1.msra.mxu0 0.0
    %823 = vmatprep.subr.mxu0 0.0
    %824 = vmatpush1.msra.mxu0 0.0
    %825 = vmatprep.subr.mxu0 0.0
    %826 = vmatpush1.msra.mxu0 0.0
    %827 = vmatprep.subr.mxu0 0.0
    %828 = vmatpush1.msra.mxu0 0.0
    %829 = vmatprep.subr.mxu0 0.0
    %830 = vmatpush1.msra.mxu0 0.0
    %831 = vmatprep.subr.mxu0 0.0
    %832 = vmatpush1.msra.mxu0 0.0
    %833 = vmatprep.subr.mxu0 0.0
    %834 = vmatpush1.msra.mxu0 0.0
    %835 = vmatprep.subr.mxu0 0.0
    %836 = vmatpush1.msra.mxu0 0.0
    %837 = vmatprep.subr.mxu0 0.0
    %838 = vmatpush1.msra.mxu0 0.0
    %839 = vmatprep.subr.mxu0 0.0
    %840 = vmatpush1.msra.mxu0 0.0
    %841 = vmatprep.subr.mxu0 0.0
    %842 = vmatpush1.msra.mxu0 0.0
    %843 = vmatprep.subr.mxu0 0.0
    %844 = vmatpush1.msra.mxu0 0.0
    %845 = vmatprep.subr.mxu0 0.0
    %846 = vmatpush1.msra.mxu0 0.0
    %847 = vmatprep.subr.mxu0 0.0
    %848 = vmatpush1.msra.mxu0 0.0
    %849 = vmatprep.subr.mxu0 0.0
    %850 = vmatpush1.msra.mxu0 0.0
    %851 = vmatprep.subr.mxu0 0.0
    %852 = vmatpush1.msra.mxu0 0.0
    %853 = vmatprep.subr.mxu0 0.0
    %854 = vmatpush1.msra.mxu0 0.0
    %855 = vmatprep.subr.mxu0 0.0
    %856 = vmatpush1.msra.mxu0 0.0
    %857 = vmatprep.subr.mxu0 0.0
    %858 = vmatpush1.msra.mxu0 0.0
    %859 = vmatprep.subr.mxu0 0.0
    %860 = vmatpush1.msra.mxu0 0.0
    %861 = vmatprep.subr.mxu0 0.0
    %862 = vmatpush1.msra.mxu0 0.0
    %863 = vmatprep.subr.mxu0 0.0
    %864 = vmatpush1.msra.mxu0 0.0
    %865 = vmatprep.subr.mxu0 0.0
    %866 = vmatpush1.msra.mxu0 0.0
    %867 = vmatprep.subr.mxu0 0.0
    %868 = vmatpush1.msra.mxu0 0.0
    %869 = vmatprep.subr.mxu0 0.0
    %870 = vmatpush1.msra.mxu0 0.0
    %871 = vmatprep.subr.mxu0 0.0
    %872 = vmatpush1.msra.mxu0 0.0
    %873 = vmatprep.mubr.f32.mxu0 0.0
    %874 = vmatmul.mubr.f32.gmra.mrb[0].mxu0 %v807
    %v875 = vpop.f32.mrb[0].mxu0
    %v876 = vadd.f32 %v196, %v875
    %v877 = vpop.f32.mrb[0].mxu0
    %878 = vdwg.mxu0
    %v879 = vxor.u32 %v876, 2147483648
    %v880 = vmul.f32 %v879, 1.442695
    %v881 = vpow.pop %v880
    %v882 = vadd.f32 %v881, 1.0
    %v883 = vrcp.pop %v882
    %v884 = vmul.f32 1.0, %v883
    %v885 = vtanh.pop %v876
    %v886 = vmul.f32 %v884, %v797
    %888 = vrot.lane.b32.xlu0 %v885, 64
    %v889 = vpop.permute.xlu0 %888
    %v891 = vmul.f32 %v884, %v889
    %893 = vrot.lane.b32.xlu0 %v891, 32
    %v894 = vpop.permute.xlu0 %893
    %v896 = vadd.f32 %v886, %v894
    %v897 = vtanh.pop %v896
    %899 = vrot.lane.b32.xlu0 %v897, 64
    %v900 = vpop.permute.xlu0 %899
    %v902 = vmul.f32 %v884, %v900
    %904 = vrot.lane.b32.xlu0 %v902, 32
    %v905 = vpop.permute.xlu0 %904
    %v906 = vsel %vm211, %v905, 0
    %908 = vmatprep.subr.mxu0 0.0
    %909 = vmatpush1.msra.mxu0 %v207
    %910 = vmatprep.subr.mxu0 0.0
    %911 = vmatpush1.msra.mxu0 %v208
    %912 = vmatprep.subr.mxu0 0.0
    %913 = vmatpush1.msra.mxu0 %v209
    %914 = vmatprep.subr.mxu0 0.0
    %915 = vmatpush1.msra.mxu0 %v210
    %916 = vmatprep.subr.mxu0 0.0
    %917 = vmatpush1.msra.mxu0 0.0
    %918 = vmatprep.subr.mxu0 0.0
    %919 = vmatpush1.msra.mxu0 0.0
    %920 = vmatprep.subr.mxu0 0.0
    %921 = vmatpush1.msra.mxu0 0.0
    %922 = vmatprep.subr.mxu0 0.0
    %923 = vmatpush1.msra.mxu0 0.0
    %924 = vmatprep.subr.mxu0 0.0
    %925 = vmatpush1.msra.mxu0 0.0
    %926 = vmatprep.subr.mxu0 0.0
    %927 = vmatpush1.msra.mxu0 0.0
    %928 = vmatprep.subr.mxu0 0.0
    %929 = vmatpush1.msra.mxu0 0.0
    %930 = vmatprep.subr.mxu0 0.0
    %931 = vmatpush1.msra.mxu0 0.0
    %932 = vmatprep.subr.mxu0 0.0
    %933 = vmatpush1.msra.mxu0 0.0
    %934 = vmatprep.subr.mxu0 0.0
    %935 = vmatpush1.msra.mxu0 0.0
    %936 = vmatprep.subr.mxu0 0.0
    %937 = vmatpush1.msra.mxu0 0.0
    %938 = vmatprep.subr.mxu0 0.0
    %939 = vmatpush1.msra.mxu0 0.0
    %940 = vmatprep.subr.mxu0 0.0
    %941 = vmatpush1.msra.mxu0 0.0
    %942 = vmatprep.subr.mxu0 0.0
    %943 = vmatpush1.msra.mxu0 0.0
    %944 = vmatprep.subr.mxu0 0.0
    %945 = vmatpush1.msra.mxu0 0.0
    %946 = vmatprep.subr.mxu0 0.0
    %947 = vmatpush1.msra.mxu0 0.0
    %948 = vmatprep.subr.mxu0 0.0
    %949 = vmatpush1.msra.mxu0 0.0
    %950 = vmatprep.subr.mxu0 0.0
    %951 = vmatpush1.msra.mxu0 0.0
    %952 = vmatprep.subr.mxu0 0.0
    %953 = vmatpush1.msra.mxu0 0.0
    %954 = vmatprep.subr.mxu0 0.0
    %955 = vmatpush1.msra.mxu0 0.0
    %956 = vmatprep.subr.mxu0 0.0
    %957 = vmatpush1.msra.mxu0 0.0
    %958 = vmatprep.subr.mxu0 0.0
    %959 = vmatpush1.msra.mxu0 0.0
    %960 = vmatprep.subr.mxu0 0.0
    %961 = vmatpush1.msra.mxu0 0.0
    %962 = vmatprep.subr.mxu0 0.0
    %963 = vmatpush1.msra.mxu0 0.0
    %964 = vmatprep.subr.mxu0 0.0
    %965 = vmatpush1.msra.mxu0 0.0
    %966 = vmatprep.subr.mxu0 0.0
    %967 = vmatpush1.msra.mxu0 0.0
    %968 = vmatprep.subr.mxu0 0.0
    %969 = vmatpush1.msra.mxu0 0.0
    %970 = vmatprep.subr.mxu0 0.0
    %971 = vmatpush1.msra.mxu0 0.0
    %972 = vmatprep.mubr.f32.mxu0 0.0
    %973 = vmatmul.mubr.f32.gmra.mrb[0].mxu0 %v906
    %v974 = vpop.f32.mrb[0].mxu0
    %v975 = vadd.f32 %v198, %v974
    %v976 = vpop.f32.mrb[0].mxu0
    %977 = vdwg.mxu0
    %v978 = vxor.u32 %v975, 2147483648
    %v979 = vmul.f32 %v978, 1.442695
    %v980 = vpow.pop %v979
    %v981 = vadd.f32 %v980, 1.0
    %v982 = vrcp.pop %v981
    %v983 = vmul.f32 1.0, %v982
    %v984 = vtanh.pop %v975
    %v985 = vmul.f32 %v983, %v896
    %987 = vrot.lane.b32.xlu0 %v984, 64
    %v988 = vpop.permute.xlu0 %987
    %v990 = vmul.f32 %v983, %v988
    %992 = vrot.lane.b32.xlu0 %v990, 32
    %v993 = vpop.permute.xlu0 %992
    %v995 = vadd.f32 %v985, %v993
    %v996 = vtanh.pop %v995
    %998 = vrot.lane.b32.xlu0 %v996, 64
    %v999 = vpop.permute.xlu0 %998
    %v1001 = vmul.f32 %v983, %v999
    %v1002 = vrot.slane %v902, 1
    %vm1004 = vcmask 1040384
    %v1005 = vsel %vm1004, %v1002, %v1001
    %v1006 = vld [vmem:[%s4] sm:$0xff]
    %v1007 = vld [vmem:[%s4 + $0x8] sm:$0xff]
    %v1008 = vld [vmem:[%s4 + $0x10] sm:$0xff]
    %v1009 = vld [vmem:[%s4 + $0x18] sm:$0xff]
    %v1010 = vld [vmem:[%s5] sm:$0x1]
    %v1012 = vlaneseq
    %v1013 = vshrl.u32 %v1012, 7
    %v1014 = vsub.s32 0, %v1013
    %v1015 = vrot.slane %v1010, %v1014
    %1018 = vrot.lane.b32.xlu0 %v1005, 32
    %v1019 = vpop.permute.xlu0 %1018
    %v1020 = vsel %vm211, %v1019, 0
    %1022 = vmatprep.subr.mxu0 0.0
    %1023 = vmatpush1.msra.mxu0 %v1006
    %1024 = vmatprep.subr.mxu0 0.0
    %1025 = vmatpush1.msra.mxu0 %v1007
    %1026 = vmatprep.subr.mxu0 0.0
    %1027 = vmatpush1.msra.mxu0 %v1008
    %1028 = vmatprep.subr.mxu0 0.0
    %1029 = vmatpush1.msra.mxu0 %v1009
    %1030 = vmatprep.subr.mxu0 0.0
    %1031 = vmatpush1.msra.mxu0 0.0
    %1032 = vmatprep.subr.mxu0 0.0
    %1033 = vmatpush1.msra.mxu0 0.0
    %1034 = vmatprep.subr.mxu0 0.0
    %1035 = vmatpush1.msra.mxu0 0.0
    %1036 = vmatprep.subr.mxu0 0.0
    %1037 = vmatpush1.msra.mxu0 0.0
    %1038 = vmatprep.subr.mxu0 0.0
    %1039 = vmatpush1.msra.mxu0 0.0
    %1040 = vmatprep.subr.mxu0 0.0
    %1041 = vmatpush1.msra.mxu0 0.0
    %1042 = vmatprep.subr.mxu0 0.0
    %1043 = vmatpush1.msra.mxu0 0.0
    %1044 = vmatprep.subr.mxu0 0.0
    %1045 = vmatpush1.msra.mxu0 0.0
    %1046 = vmatprep.subr.mxu0 0.0
    %1047 = vmatpush1.msra.mxu0 0.0
    %1048 = vmatprep.subr.mxu0 0.0
    %1049 = vmatpush1.msra.mxu0 0.0
    %1050 = vmatprep.subr.mxu0 0.0
    %1051 = vmatpush1.msra.mxu0 0.0
    %1052 = vmatprep.subr.mxu0 0.0
    %1053 = vmatpush1.msra.mxu0 0.0
    %1054 = vmatprep.subr.mxu0 0.0
    %1055 = vmatpush1.msra.mxu0 0.0
    %1056 = vmatprep.subr.mxu0 0.0
    %1057 = vmatpush1.msra.mxu0 0.0
    %1058 = vmatprep.subr.mxu0 0.0
    %1059 = vmatpush1.msra.mxu0 0.0
    %1060 = vmatprep.subr.mxu0 0.0
    %1061 = vmatpush1.msra.mxu0 0.0
    %1062 = vmatprep.subr.mxu0 0.0
    %1063 = vmatpush1.msra.mxu0 0.0
    %1064 = vmatprep.subr.mxu0 0.0
    %1065 = vmatpush1.msra.mxu0 0.0
    %1066 = vmatprep.subr.mxu0 0.0
    %1067 = vmatpush1.msra.mxu0 0.0
    %1068 = vmatprep.subr.mxu0 0.0
    %1069 = vmatpush1.msra.mxu0 0.0
    %1070 = vmatprep.subr.mxu0 0.0
    %1071 = vmatpush1.msra.mxu0 0.0
    %1072 = vmatprep.subr.mxu0 0.0
    %1073 = vmatpush1.msra.mxu0 0.0
    %1074 = vmatprep.subr.mxu0 0.0
    %1075 = vmatpush1.msra.mxu0 0.0
    %1076 = vmatprep.subr.mxu0 0.0
    %1077 = vmatpush1.msra.mxu0 0.0
    %1078 = vmatprep.subr.mxu0 0.0
    %1079 = vmatpush1.msra.mxu0 0.0
    %1080 = vmatprep.subr.mxu0 0.0
    %1081 = vmatpush1.msra.mxu0 0.0
    %1082 = vmatprep.subr.mxu0 0.0
    %1083 = vmatpush1.msra.mxu0 0.0
    %1084 = vmatprep.subr.mxu0 0.0
    %1085 = vmatpush1.msra.mxu0 0.0
    %1086 = vmatprep.mubr.f32.mxu0 0.0
    %1087 = vmatmul.mubr.f32.gmra.mrb[0].mxu0 %v1020
    %v1088 = vpop.f32.mrb[0].mxu0
    %v1089 = vadd.f32 %v1015, %v1088
    %v1090 = vpop.f32.mrb[0].mxu0
    %1091 = vdwg.mxu0
    %vm1092 = vcmask 58368
    %1093 = vst.msk [vmem:[#allocation2] sm:$0x3] %vm1092, %v1089
    // Predicated region
    $region26: #{lstm_model_forward.1} parent=1 // pred_check
      _
    $region27: #{lstm_model_forward.1} parent=1 // pred_check_branch
      %1095 = sbr.rel (0) target = $region29
    $region28: #{lstm_model_forward.1} parent=1 // pred_region
      %s1097 = ssub.s32 32, 32
      %1098 = vsyncadd [#allocation3], %s1097
      %s1100 = sshll.u32 [#allocation2], 4
      %s1101 = int_to_ptr.vmem [resolvable:$true] %s1100
      %1103 = dma.vmem_to_hbm [thread:$0]  %s1101, 32, %s6, [#allocation3]
    $region29: #{lstm_model_forward.1} parent=1 // pred_fallthru
      _
    // Predicated region
    $region30: #{lstm_model_forward.1} parent=1 // pred_check
      _
    $region31: #{lstm_model_forward.1} parent=1 // pred_check_branch
      %1105 = sbr.rel (0) target = $region33
    $region32: #{lstm_model_forward.1} parent=1 // pred_region
      %1106 = dma.done [#allocation3], 32
    $region33: #{lstm_model_forward.1} parent=1 // pred_fallthru
      _
    %1107 = vsyncpa [#allocation3], 1

</llo_original>
